<compile_context>
chip_gen: v5e
topology: v5e:2x2
jax: 0.10.0
libtpu: 0.0.40
codegen_flags: <defaults>
</compile_context>

<pallas_src>
import jax
import jax.numpy as jnp
from jax.experimental import pallas as pl
from jax.experimental.pallas import tpu as pltpu


_MAX_D_TILE = 2048
_VMEM_CAP_FALLBACK = 64 * 1024 * 1024      # v7x per-TC size: safe everywhere.
_BUDGET_CACHE = {}


def _round_up(x, m):
    return (x + m - 1) // m * m


def _sublane(itemsize):
    # Sub-32-bit dtypes pack along sublanes: f32 -> 8, bf16 -> 16, int8 -> 32.
    return 8 * max(1, 4 // int(itemsize))


def _vmem_budgets():
    """(input_budget_bytes, vmem_limit_bytes), generation-aware."""
    if "v" not in _BUDGET_CACHE:
        try:
            cap = int(pltpu.get_tpu_info().vmem_capacity_bytes)
        except Exception:
            cap = _VMEM_CAP_FALLBACK
        # Stay ~25% under physical for compiler scratch; never ask for >64 MiB.
        limit = min(64 * 1024 * 1024, (cap * 3) // 4)
        # 2 inputs x 2 pipeline buffers of (TB, TD) fit in ~3/4 of the limit
        # (headroom for the accumulator / output blocks).
        _BUDGET_CACHE["v"] = ((limit * 3) // 4, limit)
    return _BUDGET_CACHE["v"]


def _pick_d_tile(D, itemsize, sublane, input_budget):
    """Return (TD, D_pad).  D_pad != D only for pathological ragged huge D."""
    if D <= _MAX_D_TILE:
        return D, D                 # single full-D block (equals the array dim)
    for td in (2048, 1024, 512, 384, 256, 128):
        if D % td == 0:
            return td, D
    # Huge D not divisible by any 128-multiple tile: a single full-D block is
    # fine as long as it fits the budget at the minimum row tile; otherwise
    # zero-pad D to a 512 multiple so an exact 512-wide tile exists.
    if 2 * 2 * sublane * D * itemsize <= input_budget:
        return D, D
    return 512, _round_up(D, 512)


def _pick_row_tile(B_pad, TD, itemsize, sublane, input_budget):
    per_row = 2 * 2 * TD * itemsize          # 2 inputs x 2 pipeline buffers
    tb = max(sublane, (input_budget // per_row) // sublane * sublane)
    # Never make the block taller than the array; the ragged last block
    # handles any remainder (B_pad >= sublane by construction).
    tb = min(tb, (B_pad // sublane) * sublane)
    return max(tb, sublane)


def _inner_product_kernel_single(a_ref, b_ref, o_ref):
    # Single D block: VPU multiply, one cross-lane (XLU) reduce, one (TB, 1)
    # store.  No scratch, no predicated branches.
    prod = a_ref[...].astype(jnp.float32) * b_ref[...].astype(jnp.float32)
    o_ref[...] = jnp.sum(prod, axis=-1, keepdims=True).astype(o_ref.dtype)


def _inner_product_kernel_split(a_ref, b_ref, o_ref, acc_ref):
    # D is split across grid axis 1; accumulate into a lane-dense (TB, 128)
    # f32 scratch so per-step work is pure full-lane VPU adds.  The single
    # cross-lane reduction and the (TB, 1) store happen only at the last step.
    d = pl.program_id(1)

    @pl.when(d == 0)
    def _init():
        acc_ref[...] = jnp.zeros_like(acc_ref)

    prod = a_ref[...].astype(jnp.float32) * b_ref[...].astype(jnp.float32)
    td = prod.shape[-1]                       # static; multiple of 128 here
    folded = prod[:, 0:128]
    for k in range(1, td // 128):             # lane-tile-aligned slices
        folded = folded + prod[:, k * 128:(k + 1) * 128]
    acc_ref[...] += folded

    @pl.when(d == pl.num_programs(1) - 1)
    def _finalize():
        o_ref[...] = jnp.sum(acc_ref[...], axis=-1,
                             keepdims=True).astype(o_ref.dtype)


@jax.jit
def inner_product(a: jax.Array, b: jax.Array) -> jax.Array:
    """Row-wise dot product of two (B, D) arrays -> (B,)."""
    assert a.shape == b.shape and a.ndim == 2, "expected matching (B, D) inputs"
    B, D = a.shape
    dtype = a.dtype
    itemsize = jnp.dtype(dtype).itemsize
    sublane = _sublane(itemsize)
    input_budget, vmem_limit = _vmem_budgets()

    TD, D_pad = _pick_d_tile(D, itemsize, sublane, input_budget)
    if D_pad != D:
        # Pathological fallback only; zero columns contribute 0 to the dot.
        a = jnp.pad(a, ((0, 0), (0, D_pad - D)))
        b = jnp.pad(b, ((0, 0), (0, D_pad - D)))

    # Only tiny batches (< one sublane pack) are padded so the row block never
    # exceeds the array; everything else relies on the ragged last row block
    # (no full-array HBM copy).
    B_pad = B
    if B < sublane:
        B_pad = sublane
        pad_rows = ((0, B_pad - B), (0, 0))
        a = jnp.pad(a, pad_rows)
        b = jnp.pad(b, pad_rows)

    TB = _pick_row_tile(B_pad, TD, itemsize, sublane, input_budget)
    n_b = pl.cdiv(B_pad, TB)
    n_d = D_pad // TD                      # exact by construction

    cost = pl.CostEstimate(
        flops=2 * B * D,
        transcendentals=0,
        bytes_accessed=(2 * B * D + B) * itemsize,
    )

    # TODO(synk): sweep pipeline_mode=pl.Buffered(3) on the input BlockSpecs
    # for v7x configs with small per-step bytes (keep 2 if DMA already hidden).
    if n_d == 1:
        out = pl.pallas_call(
            _inner_product_kernel_single,
            out_shape=jax.ShapeDtypeStruct((B_pad, 1), dtype),
            grid_spec=pltpu.PrefetchScalarGridSpec(
                num_scalar_prefetch=0,
                grid=(n_b,),
                in_specs=[
                    pl.BlockSpec((TB, TD), lambda i: (i, 0)),
                    pl.BlockSpec((TB, TD), lambda i: (i, 0)),
                ],
                out_specs=pl.BlockSpec((TB, 1), lambda i: (i, 0)),
            ),
            compiler_params=pltpu.CompilerParams(
                dimension_semantics=("parallel",),
                vmem_limit_bytes=vmem_limit,
            ),
            cost_estimate=cost,
        )(a, b)
    else:
        out = pl.pallas_call(
            _inner_product_kernel_split,
            out_shape=jax.ShapeDtypeStruct((B_pad, 1), dtype),
            grid_spec=pltpu.PrefetchScalarGridSpec(
                num_scalar_prefetch=0,
                grid=(n_b, n_d),
                in_specs=[
                    pl.BlockSpec((TB, TD), lambda i, d: (i, d)),
                    pl.BlockSpec((TB, TD), lambda i, d: (i, d)),
                ],
                out_specs=pl.BlockSpec((TB, 1), lambda i, d: (i, 0)),
                scratch_shapes=[pltpu.VMEM((TB, 128), jnp.float32)],
            ),
            compiler_params=pltpu.CompilerParams(
                dimension_semantics=("parallel", "arbitrary"),
                vmem_limit_bytes=vmem_limit,
            ),
            cost_estimate=cost,
        )(a, b)

    # torch's .squeeze() on the (B,1,1) bmm result -> (B,)
    return out[:B, 0]


if __name__ == "__main__":
    key = jax.random.PRNGKey(0)
    ka, kb = jax.random.split(key)

    # 1) Docstring-scale check: a = b = arange(6).reshape(2, 3) -> [5, 50].
    #    Exercises the tiny-batch (< sublane) path and the n_d == 1 kernel.
    a0 = jnp.arange(6, dtype=jnp.float32).reshape(2, 3)
    b0 = jnp.arange(6, dtype=jnp.float32).reshape(2, 3)
    out0 = jax.block_until_ready(inner_product(a0, b0))
    assert out0.shape == (2,), out0.shape
    assert jnp.allclose(out0, jnp.array([5.0, 50.0])), out0

    # 2) Ragged row blocks (B not a multiple of TB, no input padding),
    #    single-D-block specialized kernel.
    B1, D1 = 130, 512
    a1 = jax.random.normal(ka, (B1, D1), dtype=jnp.float32)
    b1 = jax.random.normal(kb, (B1, D1), dtype=jnp.float32)
    out1 = jax.block_until_ready(inner_product(a1, b1))
    ref1 = jnp.sum(a1 * b1, axis=-1)
    assert out1.shape == (B1,), out1.shape
    assert jnp.allclose(out1, ref1, rtol=1e-4, atol=1e-3)

    # 3) D-split path (D = 5 x 512) + ragged row blocks + lane-dense acc.
    B2, D2 = 130, 2560
    ka2, kb2 = jax.random.split(kb)
    a2 = jax.random.normal(ka2, (B2, D2), dtype=jnp.float32)
    b2 = jax.random.normal(kb2, (B2, D2), dtype=jnp.float32)
    out2 = jax.block_until_ready(inner_product(a2, b2))
    ref2 = jnp.sum(a2 * b2, axis=-1)
    assert out2.shape == (B2,), out2.shape
    assert jnp.allclose(out2, ref2, rtol=1e-4, atol=1e-3)

    print("KERNEL_OK")
</pallas_src>

<mosaic_0001>
module attributes {stable_mosaic.version = 11 : i64} {
  func.func @_inner_product_kernel_single(%arg0: i32, %arg1: memref<8x3xf32, #tpu.memory_space<vmem>>, %arg2: memref<8x3xf32, #tpu.memory_space<vmem>>, %arg3: memref<8x1xf32, #tpu.memory_space<vmem>>) attributes {dimension_semantics = [#tpu.dimension_semantics<parallel>], iteration_bounds = array<i64: 1>, scalar_prefetch = 0 : i64, scratch_operands = 0 : i64, tpu.core_type = #tpu.core_type<tc>, window_params = [{transform_indices = @transform_0, window_bounds = array<i64: 8, 3>}, {transform_indices = @transform_1, window_bounds = array<i64: 8, 3>}, {transform_indices = @transform_2, window_bounds = array<i64: 8, 1>}]} {
    %c0 = arith.constant 0 : index
    %c0_0 = arith.constant 0 : index
    %0 = vector.load %arg1[%c0, %c0_0] : memref<8x3xf32, #tpu.memory_space<vmem>>, vector<8x3xf32>
    %c0_1 = arith.constant 0 : index
    %c0_2 = arith.constant 0 : index
    %1 = vector.load %arg2[%c0_1, %c0_2] : memref<8x3xf32, #tpu.memory_space<vmem>>, vector<8x3xf32>
    %2 = arith.mulf %0, %1 : vector<8x3xf32>
    %cst = arith.constant dense<0.000000e+00> : vector<8xf32>
    %3 = vector.multi_reduction <add>, %2, %cst [1] : vector<8x3xf32> to vector<8xf32>
    %4 = vector.shape_cast %3 : vector<8xf32> to vector<8x1xf32>
    %c0_3 = arith.constant 0 : index
    %c0_4 = arith.constant 0 : index
    %5 = vector.load %arg3[%c0_3, %c0_4] : memref<8x1xf32, #tpu.memory_space<vmem>>, vector<8x1xf32>
    tpu.vector_store %arg3[%c0_3, %c0_4], %4 {strides = array<i32>} : memref<8x1xf32, #tpu.memory_space<vmem>>, vector<8x1xf32>,
    return
  }
  func.func @transform_0(%arg0: i32) -> (i32, i32) {
    %c0_i32 = arith.constant 0 : i32
    %c0_i32_0 = arith.constant 0 : i32
    return %arg0, %c0_i32 : i32, i32
  }
  func.func @transform_1(%arg0: i32) -> (i32, i32) {
    %c0_i32 = arith.constant 0 : i32
    %c0_i32_0 = arith.constant 0 : i32
    return %arg0, %c0_i32 : i32, i32
  }
  func.func @transform_2(%arg0: i32) -> (i32, i32) {
    %c0_i32 = arith.constant 0 : i32
    %c0_i32_0 = arith.constant 0 : i32
    return %arg0, %c0_i32 : i32, i32
  }
}

</mosaic_0001>

<llo_original>
// kernel: inner_product.1
$region0: #{inner_product.1}
  #allocation0 [shape = 'u32[]', space=smem, size = 0x4, offset = 0x4, fixed_abs, tag = 'smem constant byte address 0x4 - core index']
  #allocation1 [shape = 'u32[72,128]{1,0:T(1,128)}', space=vmem, size = 0x9000, scoped, tag = 'internal scratch']
  %s0 = inlined_call_operand.vmem [shape: f32[8,3], index: 0, kind: input, shape index: {}]
  %s1 = inlined_call_operand.vmem [shape: f32[8,3], index: 1, kind: input, shape index: {}]
  %s2 = inlined_call_operand.vmem [shape: f32[8,1], index: 2, kind: output, shape index: {}]
  %s3 = sld [smem:[#allocation0]]
  $region18: #{inner_product.1} parent=0
    _
  %s5 = ssub.s32 1, %s3
  %s6 = scalar_select 0, %s5, %s3
  // Predicated region
  $region2: #{inner_product.1} parent=0 // pred_check
    _
  $region3: #{inner_product.1} parent=0 // pred_check_branch
    %8 = sbr.rel (0) target = $region5
  $region4: #{inner_product.1} parent=0 // pred_region
    _
  $region5: #{inner_product.1} parent=0 // pred_fallthru
    _
  // Predicated region
  $region6: #{inner_product.1} parent=0 // pred_check
    _
  $region7: #{inner_product.1} parent=0 // pred_check_branch
    %10 = sbr.rel (0) target = $region9
  $region8: #{inner_product.1} parent=0 // pred_region
    _
  $region9: #{inner_product.1} parent=0 // pred_fallthru
    _
  %v11 = vld [vmem:[%s0] sm:$0xff]
  %v12 = vld [vmem:[%s1] sm:$0xff]
  %v13 = vmul.f32 %v11, %v12
  %vm14 = vcmask 23552
  %v15 = vsel %vm14, %v13, 0.0
  %16 = vadd.xlane.f32.xlu0 %v15
  %v17 = vpop.xlane.xlu0 %16
  %vm18 = vcmask 7168
  %19 = vst.msk [vmem:[%s2] sm:$0xff] %vm18, %v17
  // Predicated region
  $region10: #{inner_product.1} parent=0 // pred_check
    _
  $region11: #{inner_product.1} parent=0 // pred_check_branch
    %21 = sbr.rel (0) target = $region13
  $region12: #{inner_product.1} parent=0 // pred_region
    _
  $region13: #{inner_product.1} parent=0 // pred_fallthru
    _
  // Predicated region
  $region14: #{inner_product.1} parent=0 // pred_check
    _
  $region15: #{inner_product.1} parent=0 // pred_check_branch
    %23 = sbr.rel (0) target = $region17
  $region16: #{inner_product.1} parent=0 // pred_region
    _
  $region17: #{inner_product.1} parent=0 // pred_fallthru
    _

</llo_original>
